<compile_context>
chip_gen: v7x
topology: tpu7x:2x2x1
jax: 0.10.0
libtpu: 0.0.40
codegen_flags: <defaults>
</compile_context>

<pallas_src>
import jax
import jax.numpy as jnp
import numpy as np
from jax.experimental import pallas as pl
from jax.experimental.pallas import tpu as pltpu


def attention_block_kernel(g_ref, x_ref, wg_ref, wx_ref, b_ref, wp_ref, bp_ref,
                           out_ref):
    # g_ref:  (F_g, tn)      x_ref: (F_l, tn)     (batch dim squeezed)
    # wg_ref: (F_int, F_g)   wx_ref: (F_int, F_l)
    # b_ref:  (F_int, 1) f32 fused conv+BN bias (bg + bx)
    # wp_ref: (1, F_int)     bp_ref: (1,) f32 scalar in SMEM
    # out_ref: (2, tn) -> row 0 = psi, row 1 = 1 - psi
    g = g_ref[...].astype(jnp.float32)
    x = x_ref[...].astype(jnp.float32)

    # W_g / W_x projections: N stays on lanes, contraction over the tiny
    # channel dims on the MXU, f32 accumulation.
    h = (jnp.dot(wg_ref[...], g, preferred_element_type=jnp.float32)
         + jnp.dot(wx_ref[...], x, preferred_element_type=jnp.float32)
         + b_ref[...])                                   # (F_int, tn) f32

    # leaky_relu(., negative_slope=0.2): slope < 1 so max(h, 0.2h) == lrelu(h).
    h = jnp.maximum(h, 0.2 * h)

    # psi projection: (1, F_int) x (F_int, tn) mat-vec on the MXU in f32
    # (no bf16 cast pass), scalar bias from SMEM, sigmoid on the EUP.
    logit = (jnp.dot(wp_ref[...], h, preferred_element_type=jnp.float32)
             + bp_ref[0])                                # (1, tn) f32
    psi = jax.nn.sigmoid(logit)

    # Single packed store: one output block / one DMA per step.
    out_ref[...] = jnp.concatenate([psi, 1.0 - psi], axis=0).astype(out_ref.dtype)


def _fold_bn(w, b, gamma, beta, mean, var, eps=1e-5):
    """Fold eval-mode BatchNorm1d into a 1x1-conv weight/bias.

    w: (C_out, C_in); b/gamma/beta/mean/var: (C_out,).
    """
    s = gamma / jnp.sqrt(var + eps)
    return w * s[:, None], (b - mean) * s + beta


def _vmem_budget_bytes():
    """Conservative per-kernel VMEM budget derived from the actual chip."""
    try:
        cap = int(pltpu.get_tpu_info().vmem_capacity_bytes)
    except Exception:
        cap = 64 * 1024 * 1024
    # Stay comfortably inside the default scoped-VMEM limit on every
    # generation (16 MiB on v5e, 32 MiB on v6e, 32-of-64 MiB on v7x).
    return int(min(cap // 8, 16 * 1024 * 1024))


def _choose_tn(n, per_lane_bytes, vmem_budget):
    """Largest lane tile whose per-step footprint fits the VMEM budget.

    Prefers a 128-multiple divisor of N (no padded tail). If none exists,
    returns the capped 128-multiple and relies on a cdiv grid: columns are
    independent, so the out-of-bounds tail is harmless (its writes are
    dropped by Pallas).
    """
    cap = vmem_budget // max(per_lane_bytes, 1)
    cap = min(cap, 64 * 1024)             # diminishing returns past ~64K lanes
    if n <= cap:
        return n                          # full extent: always layout-legal
    cap = max(128, (cap // 128) * 128)
    t = cap
    while t >= 128:
        if n % t == 0:
            return t
        t -= 128
    return cap                            # cdiv grid with masked tail


def attention_block(g_ncw, x_ncw, params, *, tn=None):
    """g_ncw: (B, F_g, N), x_ncw: (B, F_l, N) -> (psi, 1 - psi), each (B, 1, N)."""
    B, F_g, N = g_ncw.shape
    F_l = x_ncw.shape[1]

    wg, bg = _fold_bn(*params['W_g'])      # (F_int, F_g), (F_int,)
    wx, bx = _fold_bn(*params['W_x'])      # (F_int, F_l), (F_int,)
    wp, bp = _fold_bn(*params['psi'])      # (1, F_int),   (1,)
    F_int = wg.shape[0]

    out_dtype = g_ncw.dtype
    in_bytes = jnp.dtype(g_ncw.dtype).itemsize
    out_bytes = jnp.dtype(out_dtype).itemsize

    if tn is None:
        # Double-buffered activation inputs + packed output, plus the f32
        # (F_int, tn) intermediate (and a temp) that live during compute.
        per_lane = (2 * ((F_g + F_l) * in_bytes + 2 * out_bytes)
                    + 2 * F_int * 4)
        tn = _choose_tn(N, per_lane, _vmem_budget_bytes())

    n_tiles = pl.cdiv(N, tn)
    if B * n_tiles < 2 and N >= 256:
        # Ensure >= 2 grid iterations so both TensorCores on v7x get work.
        tn = ((pl.cdiv(N, 2) + 127) // 128) * 128
        n_tiles = pl.cdiv(N, tn)
    grid = (B, n_tiles)                    # both axes independent -> megacore

    wg_f = wg.astype(jnp.float32)                         # (F_int, F_g)
    wx_f = wx.astype(jnp.float32)                         # (F_int, F_l)
    wp_f = wp.astype(jnp.float32)                         # (1, F_int)
    b_col = (bg + bx).astype(jnp.float32).reshape(F_int, 1)   # fused bias
    bp_vec = bp.astype(jnp.float32).reshape(1)            # scalar bias -> SMEM

    packed = pl.pallas_call(
        attention_block_kernel,
        out_shape=jax.ShapeDtypeStruct((B, 2, N), out_dtype),
        grid_spec=pltpu.PrefetchScalarGridSpec(
            num_scalar_prefetch=0,
            grid=grid,
            in_specs=[
                # Activations: batch squeezed into the grid, N on lanes.
                pl.BlockSpec((None, F_g, tn), lambda b, i: (b, 0, i)),
                pl.BlockSpec((None, F_l, tn), lambda b, i: (b, 0, i)),
                # Weights / biases: tiny constant blocks.
                pl.BlockSpec((F_int, F_g), lambda b, i: (0, 0)),
                pl.BlockSpec((F_int, F_l), lambda b, i: (0, 0)),
                pl.BlockSpec((F_int, 1), lambda b, i: (0, 0)),
                pl.BlockSpec((1, F_int), lambda b, i: (0, 0)),
                # psi's scalar bias lives in SMEM (no padded VMEM block).
                pl.BlockSpec(memory_space=pltpu.MemorySpace.SMEM),
            ],
            out_specs=pl.BlockSpec((None, 2, tn), lambda b, i: (b, 0, i)),
        ),
        compiler_params=pltpu.CompilerParams(
            dimension_semantics=("parallel", "parallel")),
    )(g_ncw, x_ncw, wg_f, wx_f, b_col, wp_f, bp_vec)

    # Lazy slices; the (B, 2, N) pack keeps the kernel's output DMA dense.
    psi = packed[:, 0:1, :]
    inv_psi = packed[:, 1:2, :]
    return psi, inv_psi


def attention_block_reference(g_ncw, x_ncw, params, eps=1e-5):
    """Pure-JAX NCW reference matching the PyTorch forward (eval-mode BN)."""
    def conv_bn(z, w, b, gamma, beta, mean, var):
        y = jnp.einsum('oc,bcn->bon', w, z) + b[None, :, None]
        s = gamma / jnp.sqrt(var + eps)
        return (y - mean[None, :, None]) * s[None, :, None] + beta[None, :, None]

    g1 = conv_bn(g_ncw, *params['W_g'])
    x1 = conv_bn(x_ncw, *params['W_x'])
    h = g1 + x1
    h = jnp.where(h > 0, h, 0.2 * h)
    psi = jax.nn.sigmoid(conv_bn(h, *params['psi']))
    return psi, 1.0 - psi


def make_params(key, F_g, F_l, F_int, dtype=jnp.float32):
    ks = jax.random.split(key, 12)

    def conv_bn_params(k0, k1, k2, k3, c_out, c_in):
        w = jax.random.normal(k0, (c_out, c_in), dtype) * 0.1
        b = jax.random.normal(k1, (c_out,), dtype) * 0.1
        gamma = 1.0 + 0.1 * jax.random.normal(k2, (c_out,), dtype)
        beta = 0.1 * jax.random.normal(k3, (c_out,), dtype)
        mean = 0.05 * jnp.arange(c_out, dtype=dtype)
        var = 1.0 + 0.01 * jnp.arange(c_out, dtype=dtype)
        return (w, b, gamma, beta, mean, var)

    return {
        'W_g': conv_bn_params(ks[0], ks[1], ks[2], ks[3], F_int, F_g),
        'W_x': conv_bn_params(ks[4], ks[5], ks[6], ks[7], F_int, F_l),
        'psi': conv_bn_params(ks[8], ks[9], ks[10], ks[11], 1, F_int),
    }


if __name__ == "__main__":
    B, F_g, F_l, F_int, N = 2, 8, 6, 32, 256

    key = jax.random.PRNGKey(0)
    kg, kx, kp = jax.random.split(key, 3)
    g = jax.random.normal(kg, (B, F_g, N), jnp.float32)   # PyTorch NCW input
    x = jax.random.normal(kx, (B, F_l, N), jnp.float32)
    params = make_params(kp, F_g, F_l, F_int)

    psi, inv_psi = attention_block(g, x, params)
    psi, inv_psi = jax.block_until_ready((psi, inv_psi))

    psi_ref, inv_psi_ref = attention_block_reference(g, x, params)
    # MXU default matmul precision (bf16 passes, f32 accumulation) -> modest
    # tolerances; values are post-sigmoid so well-conditioned.
    np.testing.assert_allclose(np.asarray(psi), np.asarray(psi_ref),
                               rtol=2e-2, atol=5e-3)
    np.testing.assert_allclose(np.asarray(inv_psi), np.asarray(inv_psi_ref),
                               rtol=2e-2, atol=5e-3)

    print("KERNEL_OK")
</pallas_src>

<mosaic_0001>
module attributes {stable_mosaic.version = 11 : i64} {
  func.func @attention_block_kernel(%arg0: i32, %arg1: i32, %arg2: memref<1x8x256xf32, #tpu.memory_space<vmem>>, %arg3: memref<1x6x256xf32, #tpu.memory_space<vmem>>, %arg4: memref<32x8xf32, #tpu.memory_space<vmem>>, %arg5: memref<32x6xf32, #tpu.memory_space<vmem>>, %arg6: memref<32x1xf32, #tpu.memory_space<vmem>>, %arg7: memref<1x32xf32, #tpu.memory_space<vmem>>, %arg8: memref<1xf32, #tpu.memory_space<smem>>, %arg9: memref<1x2x256xf32, #tpu.memory_space<vmem>>) attributes {dimension_semantics = [#tpu.dimension_semantics<parallel>, #tpu.dimension_semantics<parallel>], iteration_bounds = array<i64: 2, 1>, scalar_prefetch = 0 : i64, scratch_operands = 0 : i64, tpu.core_type = #tpu.core_type<tc>, window_params = [{transform_indices = @transform_0, window_bounds = array<i64: 1, 8, 256>}, {transform_indices = @transform_1, window_bounds = array<i64: 1, 6, 256>}, {pipeline_mode = #tpu.pipeline_mode<synchronous>, transform_indices = @transform_2, window_bounds = array<i64: 32, 8>}, {pipeline_mode = #tpu.pipeline_mode<synchronous>, transform_indices = @transform_3, window_bounds = array<i64: 32, 6>}, {pipeline_mode = #tpu.pipeline_mode<synchronous>, transform_indices = @transform_4, window_bounds = array<i64: 32, 1>}, {pipeline_mode = #tpu.pipeline_mode<synchronous>, transform_indices = @transform_5, window_bounds = array<i64: 1, 32>}, {transform_indices = @transform_6, window_bounds = array<i64: 1>}, {transform_indices = @transform_7, window_bounds = array<i64: 1, 2, 256>}]} {
    %c0 = arith.constant 0 : index
    %c0_0 = arith.constant 0 : index
    %c0_1 = arith.constant 0 : index
    %0 = vector.load %arg2[%c0, %c0_0, %c0_1] : memref<1x8x256xf32, #tpu.memory_space<vmem>>, vector<1x8x256xf32>
    %1 = vector.shape_cast %0 : vector<1x8x256xf32> to vector<8x256xf32>
    %c0_2 = arith.constant 0 : index
    %c0_3 = arith.constant 0 : index
    %c0_4 = arith.constant 0 : index
    %2 = vector.load %arg3[%c0_2, %c0_3, %c0_4] : memref<1x6x256xf32, #tpu.memory_space<vmem>>, vector<1x6x256xf32>
    %3 = vector.shape_cast %2 : vector<1x6x256xf32> to vector<6x256xf32>
    %c0_5 = arith.constant 0 : index
    %c0_6 = arith.constant 0 : index
    %4 = vector.load %arg4[%c0_5, %c0_6] : memref<32x8xf32, #tpu.memory_space<vmem>>, vector<32x8xf32>
    %cst = arith.constant dense<0.000000e+00> : vector<32x256xf32>
    %5 = tpu.matmul %4, %1, %cst {dimension_numbers = #tpu.dot_dimension_numbers<[1], [0], [0], [1], [0, 0, 1, 1], [], []>} : vector<32x8xf32>, vector<8x256xf32>, vector<32x256xf32> -> vector<32x256xf32>
    %c0_7 = arith.constant 0 : index
    %c0_8 = arith.constant 0 : index
    %6 = vector.load %arg5[%c0_7, %c0_8] : memref<32x6xf32, #tpu.memory_space<vmem>>, vector<32x6xf32>
    %cst_9 = arith.constant dense<0.000000e+00> : vector<32x256xf32>
    %7 = tpu.matmul %6, %3, %cst_9 {dimension_numbers = #tpu.dot_dimension_numbers<[1], [0], [0], [1], [0, 0, 1, 1], [], []>} : vector<32x6xf32>, vector<6x256xf32>, vector<32x256xf32> -> vector<32x256xf32>
    %8 = arith.addf %5, %7 : vector<32x256xf32>
    %c0_10 = arith.constant 0 : index
    %c0_11 = arith.constant 0 : index
    %9 = vector.load %arg6[%c0_10, %c0_11] : memref<32x1xf32, #tpu.memory_space<vmem>>, vector<32x1xf32>
    %10 = vector.broadcast %9 : vector<32x1xf32> to vector<32x256xf32>
    %11 = arith.addf %8, %10 : vector<32x256xf32>
    %cst_12 = arith.constant 2.000000e-01 : f32
    %12 = vector.broadcast %cst_12 : f32 to vector<32x256xf32>
    %13 = arith.mulf %12, %11 : vector<32x256xf32>
    %14 = arith.maximumf %11, %13 : vector<32x256xf32>
    %c0_13 = arith.constant 0 : index
    %c0_14 = arith.constant 0 : index
    %15 = vector.load %arg7[%c0_13, %c0_14] : memref<1x32xf32, #tpu.memory_space<vmem>>, vector<1x32xf32>
    %cst_15 = arith.constant dense<0.000000e+00> : vector<1x256xf32>
    %16 = tpu.matmul %15, %14, %cst_15 {dimension_numbers = #tpu.dot_dimension_numbers<[1], [0], [0], [1], [0, 0, 1, 1], [], []>} : vector<1x32xf32>, vector<32x256xf32>, vector<1x256xf32> -> vector<1x256xf32>
    %c0_16 = arith.constant 0 : index
    %17 = memref.load %arg8[%c0_16] : memref<1xf32, #tpu.memory_space<smem>>
    %18 = vector.broadcast %17 : f32 to vector<1x256xf32>
    %19 = arith.addf %16, %18 : vector<1x256xf32>
    %20 = arith.negf %19 : vector<1x256xf32>
    %21 = math.exp %20 : vector<1x256xf32>
    %cst_17 = arith.constant 1.000000e+00 : f32
    %22 = vector.broadcast %cst_17 : f32 to vector<1x256xf32>
    %23 = arith.addf %22, %21 : vector<1x256xf32>
    %24 = arith.divf %22, %23 : vector<1x256xf32>
    %cst_18 = arith.constant 1.000000e+00 : f32
    %25 = vector.broadcast %cst_18 : f32 to vector<1x256xf32>
    %26 = arith.subf %25, %24 : vector<1x256xf32>
    %27 = tpu.concatenate %24, %26 in 0 : vector<1x256xf32>, vector<1x256xf32> -> vector<2x256xf32>
    %c0_19 = arith.constant 0 : index
    %c0_20 = arith.constant 0 : index
    %c0_21 = arith.constant 0 : index
    %28 = vector.load %arg9[%c0_19, %c0_20, %c0_21] : memref<1x2x256xf32, #tpu.memory_space<vmem>>, vector<1x2x256xf32>
    %29 = vector.shape_cast %28 : vector<1x2x256xf32> to vector<2x256xf32>
    %30 = vector.shape_cast %27 : vector<2x256xf32> to vector<1x2x256xf32>
    tpu.vector_store %arg9[%c0_19, %c0_20, %c0_21], %30 {strides = array<i32>} : memref<1x2x256xf32, #tpu.memory_space<vmem>>, vector<1x2x256xf32>,
    return
  }
  func.func @transform_0(%arg0: i32, %arg1: i32) -> (i32, i32, i32) {
    %c0_i32 = arith.constant 0 : i32
    %c0_i32_0 = arith.constant 0 : i32
    return %arg0, %c0_i32, %arg1 : i32, i32, i32
  }
  func.func @transform_1(%arg0: i32, %arg1: i32) -> (i32, i32, i32) {
    %c0_i32 = arith.constant 0 : i32
    %c0_i32_0 = arith.constant 0 : i32
    return %arg0, %c0_i32, %arg1 : i32, i32, i32
  }
  func.func @transform_2(%arg0: i32, %arg1: i32) -> (i32, i32) {
    %c0_i32 = arith.constant 0 : i32
    %c0_i32_0 = arith.constant 0 : i32
    %c0_i32_1 = arith.constant 0 : i32
    return %c0_i32, %c0_i32_0 : i32, i32
  }
  func.func @transform_3(%arg0: i32, %arg1: i32) -> (i32, i32) {
    %c0_i32 = arith.constant 0 : i32
    %c0_i32_0 = arith.constant 0 : i32
    %c0_i32_1 = arith.constant 0 : i32
    return %c0_i32, %c0_i32_0 : i32, i32
  }
  func.func @transform_4(%arg0: i32, %arg1: i32) -> (i32, i32) {
    %c0_i32 = arith.constant 0 : i32
    %c0_i32_0 = arith.constant 0 : i32
    %c0_i32_1 = arith.constant 0 : i32
    return %c0_i32, %c0_i32_0 : i32, i32
  }
  func.func @transform_5(%arg0: i32, %arg1: i32) -> (i32, i32) {
    %c0_i32 = arith.constant 0 : i32
    %c0_i32_0 = arith.constant 0 : i32
    %c0_i32_1 = arith.constant 0 : i32
    return %c0_i32, %c0_i32_0 : i32, i32
  }
  func.func @transform_6(%arg0: i32, %arg1: i32) -> i32 {
    %c0_i32 = arith.constant 0 : i32
    %c0_i32_0 = arith.constant 0 : i32
    return %c0_i32 : i32
  }
  func.func @transform_7(%arg0: i32, %arg1: i32) -> (i32, i32, i32) {
    %c0_i32 = arith.constant 0 : i32
    %c0_i32_0 = arith.constant 0 : i32
    return %arg0, %c0_i32, %arg1 : i32, i32, i32
  }
}

</mosaic_0001>

<llo_original>
// kernel: tpu_custom_call.1
$region0: #{tpu_custom_call.1}
  #allocation0 [shape = 'u32[]', space=smem, size = 0x4, offset = 0x4, fixed_abs, tag = 'smem constant byte address 0x4 - core index']
  #allocation1 [shape = 'u32[144,128]{1,0:T(1,128)}', space=vmem, size = 0x12000, scoped, tag = 'internal scratch']
  #allocation2 [shape = 'f32[1]{0:T(128)S(6)}', space=smem, size = 0x200, scoped, tag = 'scoped memory for tpu_custom_call.1']
  %s0 = inlined_call_operand.vmem [shape: f32[2,8,256], index: 0, kind: input, shape index: {}]
  %s1 = inlined_call_operand.vmem [shape: f32[2,6,256], index: 1, kind: input, shape index: {}]
  %s2 = inlined_call_operand.vmem [shape: f32[32,8], index: 2, kind: input, shape index: {}]
  %s3 = inlined_call_operand.vmem [shape: f32[32,6], index: 3, kind: input, shape index: {}]
  %s4 = inlined_call_operand.vmem [shape: f32[32,1], index: 4, kind: input, shape index: {}]
  %s5 = inlined_call_operand.vmem [shape: f32[1,32], index: 5, kind: input, shape index: {}]
  %s6 = inlined_call_operand.<no memory space> [shape: f32[1], index: 6, kind: input, shape index: {}]
  %s7 = inlined_call_operand.hbm [shape: f32[2,2,256], index: 7, kind: output, shape index: {}]
  %s8 = sld [smem:[#allocation0]]
  $region61: #{tpu_custom_call.1} parent=0
    _
  %s10 = ssub.s32 1, %s8
  %s11 = scalar_select 0, %s10, %s8
  %12 = sst [smem:[#allocation2]] %s6
  $region1: #{tpu_custom_call.1} parent=0
    #allocation3 [shape = 'u8[4096]{0}', space=vmem, size = 0x1000, scoped, tag = 'output window, operand 0']
    #allocation4 [shape = 's32[2]{0}', space=sflag, size = 0x8, scoped, tag = 'scoped memory for tpu_custom_call.1']
    %13 = vsyncpa [#allocation4], 0
    %s14 = scalar_lea.sflag [#allocation4], 1
    %15 = vsyncpa %s14, 0
    loop: start=0, step=1, limit=4
    $region2: #{tpu_custom_call.1} parent=1 // loop_pre_header
      _
    $region3: #{tpu_custom_call.1} parent=1 // loop_header
      %s17 = sphi 0, %s21
      %p18 = scmp.ge.s32.totalorder %s17, 4
      %s24 = sphi 0, %s36
      %s25 = sphi 0, %s32
      %s26 = sphi 0, %s24
      %s27 = sphi 0, %s25
      %s28 = sphi 0, %s26
      %s29 = sphi 0, %s27
      %s41 = sphi 0, %s43
      %s44 = sphi 0, %s41
      %s45 = sphi 0, %s44
      %s61 = sphi 0, %s45
      %s69 = sphi 0, %s71
      %s72 = sphi 0, %s69
      %s73 = sphi 0, %s72
      %s89 = sphi 0, %s73
      %s93 = sphi 0, %s93
      %s95 = sphi 0, %s93
      %s96 = sphi 0, %s95
      %s110 = sphi 0, %s96
      %s114 = sphi 0, %s114
      %s116 = sphi 0, %s114
      %s117 = sphi 0, %s116
      %s131 = sphi 0, %s117
      %s135 = sphi 0, %s135
      %s137 = sphi 0, %s135
      %s138 = sphi 0, %s137
      %s152 = sphi 0, %s138
      %s156 = sphi 0, %s156
      %s158 = sphi 0, %s156
      %s159 = sphi 0, %s158
      %s173 = sphi 0, %s159
      %s177 = sphi 0, %s177
      %s179 = sphi 0, %s177
      %s180 = sphi 0, %s179
      %s194 = sphi 0, %s180
      %s202 = sphi 0, %s204
      %s205 = sphi 0, %s202
      %s206 = sphi 0, %s205
      %s222 = sphi 0, %s206
    $region4: #{tpu_custom_call.1} parent=1 // loop_header_branch
      %20 = sbr.rel (%p18) target = $region8
    $region5: #{tpu_custom_call.1} parent=1 // loop_body
      %s22 = ssub.s32 %s17, 1
      %s23 = ssub.s32 %s17, 2
      %s30 = sadd.s32 1, %s25
      %p31 = scmp.ge.s32.totalorder %s30, 1
      %s32 = scalar_select %p31, 0, %s30
      %s33 = sadd.s32 1, %s24
      %s34 = scalar_select %p31, %s33, %s24
      %p35 = scmp.ge.s32.totalorder %s34, 2
      %s36 = scalar_select %p35, 0, %s34
      %s37 = ssub.s32 %s24, %s36
      %s38 = ssub.s32 %s25, %s32
      %s39 = sor.u32 %s37, %s38
      %p40 = scmp.eq.s32.totalorder %s39, 0
      %s42 = sadd.s32 %s41, 1
      %s43 = scalar_select %p40, %s41, %s42
      %p46 = pneg %p40
      %p47 = scmp.eq.s32.totalorder %s17, 1
      %p48 = por %p46, %p47
      %p49 = scmp.ne.s32.totalorder %s41, %s44
      %p50 = scmp.eq.s32.totalorder %s17, 0
      %p51 = por %p49, %p50
      %p52 = scmp.ne.s32.totalorder %s41, %s44
      %p53 = scmp.eq.s32.totalorder %s22, 1
      %p54 = por %p52, %p53
      %p55 = scmp.ne.s32.totalorder %s44, %s45
      %p56 = scmp.eq.s32.totalorder %s22, 0
      %p57 = por %p55, %p56
      %p58 = scmp.ne.s32.totalorder %s44, %s45
      %p59 = scmp.eq.s32.totalorder %s23, 1
      %p60 = por %p58, %p59
      %p62 = scmp.ne.s32.totalorder %s45, %s61
      %p63 = scmp.eq.s32.totalorder %s23, 0
      %p64 = por %p62, %p63
      %s65 = ssub.s32 %s24, %s36
      %s66 = ssub.s32 %s25, %s32
      %s67 = sor.u32 %s65, %s66
      %p68 = scmp.eq.s32.totalorder %s67, 0
      %s70 = sadd.s32 %s69, 1
      %s71 = scalar_select %p68, %s69, %s70
      %p74 = pneg %p68
      %p75 = scmp.eq.s32.totalorder %s17, 1
      %p76 = por %p74, %p75
      %p77 = scmp.ne.s32.totalorder %s69, %s72
      %p78 = scmp.eq.s32.totalorder %s17, 0
      %p79 = por %p77, %p78
      %p80 = scmp.ne.s32.totalorder %s69, %s72
      %p81 = scmp.eq.s32.totalorder %s22, 1
      %p82 = por %p80, %p81
      %p83 = scmp.ne.s32.totalorder %s72, %s73
      %p84 = scmp.eq.s32.totalorder %s22, 0
      %p85 = por %p83, %p84
      %p86 = scmp.ne.s32.totalorder %s72, %s73
      %p87 = scmp.eq.s32.totalorder %s23, 1
      %p88 = por %p86, %p87
      %p90 = scmp.ne.s32.totalorder %s73, %s89
      %p91 = scmp.eq.s32.totalorder %s23, 0
      %p92 = por %p90, %p91
      %s94 = sadd.s32 %s93, 1
      %p97 = scmp.eq.s32.totalorder %s17, 1
      %p98 = scmp.ne.s32.totalorder %s93, %s95
      %p99 = scmp.eq.s32.totalorder %s17, 0
      %p100 = por %p98, %p99
      %p101 = scmp.ne.s32.totalorder %s93, %s95
      %p102 = scmp.eq.s32.totalorder %s22, 1
      %p103 = por %p101, %p102
      %p104 = scmp.ne.s32.totalorder %s95, %s96
      %p105 = scmp.eq.s32.totalorder %s22, 0
      %p106 = por %p104, %p105
      %p107 = scmp.ne.s32.totalorder %s95, %s96
      %p108 = scmp.eq.s32.totalorder %s23, 1
      %p109 = por %p107, %p108
      %p111 = scmp.ne.s32.totalorder %s96, %s110
      %p112 = scmp.eq.s32.totalorder %s23, 0
      %p113 = por %p111, %p112
      %s115 = sadd.s32 %s114, 1
      %p118 = scmp.eq.s32.totalorder %s17, 1
      %p119 = scmp.ne.s32.totalorder %s114, %s116
      %p120 = scmp.eq.s32.totalorder %s17, 0
      %p121 = por %p119, %p120
      %p122 = scmp.ne.s32.totalorder %s114, %s116
      %p123 = scmp.eq.s32.totalorder %s22, 1
      %p124 = por %p122, %p123
      %p125 = scmp.ne.s32.totalorder %s116, %s117
      %p126 = scmp.eq.s32.totalorder %s22, 0
      %p127 = por %p125, %p126
      %p128 = scmp.ne.s32.totalorder %s116, %s117
      %p129 = scmp.eq.s32.totalorder %s23, 1
      %p130 = por %p128, %p129
      %p132 = scmp.ne.s32.totalorder %s117, %s131
      %p133 = scmp.eq.s32.totalorder %s23, 0
      %p134 = por %p132, %p133
      %s136 = sadd.s32 %s135, 1
      %p139 = scmp.eq.s32.totalorder %s17, 1
      %p140 = scmp.ne.s32.totalorder %s135, %s137
      %p141 = scmp.eq.s32.totalorder %s17, 0
      %p142 = por %p140, %p141
      %p143 = scmp.ne.s32.totalorder %s135, %s137
      %p144 = scmp.eq.s32.totalorder %s22, 1
      %p145 = por %p143, %p144
      %p146 = scmp.ne.s32.totalorder %s137, %s138
      %p147 = scmp.eq.s32.totalorder %s22, 0
      %p148 = por %p146, %p147
      %p149 = scmp.ne.s32.totalorder %s137, %s138
      %p150 = scmp.eq.s32.totalorder %s23, 1
      %p151 = por %p149, %p150
      %p153 = scmp.ne.s32.totalorder %s138, %s152
      %p154 = scmp.eq.s32.totalorder %s23, 0
      %p155 = por %p153, %p154
      %s157 = sadd.s32 %s156, 1
      %p160 = scmp.eq.s32.totalorder %s17, 1
      %p161 = scmp.ne.s32.totalorder %s156, %s158
      %p162 = scmp.eq.s32.totalorder %s17, 0
      %p163 = por %p161, %p162
      %p164 = scmp.ne.s32.totalorder %s156, %s158
      %p165 = scmp.eq.s32.totalorder %s22, 1
      %p166 = por %p164, %p165
      %p167 = scmp.ne.s32.totalorder %s158, %s159
      %p168 = scmp.eq.s32.totalorder %s22, 0
      %p169 = por %p167, %p168
      %p170 = scmp.ne.s32.totalorder %s158, %s159
      %p171 = scmp.eq.s32.totalorder %s23, 1
      %p172 = por %p170, %p171
      %p174 = scmp.ne.s32.totalorder %s159, %s173
      %p175 = scmp.eq.s32.totalorder %s23, 0
      %p176 = por %p174, %p175
      %s178 = sadd.s32 %s177, 1
      %p181 = scmp.eq.s32.totalorder %s17, 1
      %p182 = scmp.ne.s32.totalorder %s177, %s179
      %p183 = scmp.eq.s32.totalorder %s17, 0
      %p184 = por %p182, %p183
      %p185 = scmp.ne.s32.totalorder %s177, %s179
      %p186 = scmp.eq.s32.totalorder %s22, 1
      %p187 = por %p185, %p186
      %p188 = scmp.ne.s32.totalorder %s179, %s180
      %p189 = scmp.eq.s32.totalorder %s22, 0
      %p190 = por %p188, %p189
      %p191 = scmp.ne.s32.totalorder %s179, %s180
      %p192 = scmp.eq.s32.totalorder %s23, 1
      %p193 = por %p191, %p192
      %p195 = scmp.ne.s32.totalorder %s180, %s194
      %p196 = scmp.eq.s32.totalorder %s23, 0
      %p197 = por %p195, %p196
      %s198 = ssub.s32 %s24, %s36
      %s199 = ssub.s32 %s25, %s32
      %s200 = sor.u32 %s198, %s199
      %p201 = scmp.eq.s32.totalorder %s200, 0
      %s203 = sadd.s32 %s202, 1
      %s204 = scalar_select %p201, %s202, %s203
      %p207 = pneg %p201
      %p208 = scmp.eq.s32.totalorder %s17, 1
      %p209 = por %p207, %p208
      %p210 = scmp.ne.s32.totalorder %s202, %s205
      %p211 = scmp.eq.s32.totalorder %s17, 0
      %p212 = por %p210, %p211
      %p213 = scmp.ne.s32.totalorder %s202, %s205
      %p214 = scmp.eq.s32.totalorder %s22, 1
      %p215 = por %p213, %p214
      %p216 = scmp.ne.s32.totalorder %s205, %s206
      %p217 = scmp.eq.s32.totalorder %s22, 0
      %p218 = por %p216, %p217
      %p219 = scmp.ne.s32.totalorder %s205, %s206
      %p220 = scmp.eq.s32.totalorder %s23, 1
      %p221 = por %p219, %p220
      %p223 = scmp.ne.s32.totalorder %s206, %s222
      %p224 = scmp.eq.s32.totalorder %s23, 0
      %p225 = por %p223, %p224
      %p226 = scmp.le.s32.totalorder 1, %s17
      %p227 = scmp.lt.s32.totalorder %s17, 3
      %p228 = pnand %p226, %p227
      %p229 = pneg %p228
      // Predicated region
      $region9: #{tpu_custom_call.1} parent=5 // pred_check
        _
      $region10: #{tpu_custom_call.1} parent=5 // pred_check_branch
        %231 = sbr.rel (%p228) target = $region12
      $region11: #{tpu_custom_call.1} parent=5 // pred_region
        %s232 = ssub.s32 %s17, 1
        // Predicated region
        $region13: #{tpu_custom_call.1} parent=11 // pred_check
          %p233 = pneg %p106
        $region14: #{tpu_custom_call.1} parent=11 // pred_check_branch
          %235 = sbr.rel (%p233) target = $region16
        $region15: #{tpu_custom_call.1} parent=11 // pred_region
          _
        $region16: #{tpu_custom_call.1} parent=11 // pred_fallthru
          _
        // Predicated region
        $region17: #{tpu_custom_call.1} parent=11 // pred_check
          %p236 = pneg %p127
        $region18: #{tpu_custom_call.1} parent=11 // pred_check_branch
          %238 = sbr.rel (%p236) target = $region20
        $region19: #{tpu_custom_call.1} parent=11 // pred_region
          _
        $region20: #{tpu_custom_call.1} parent=11 // pred_fallthru
          _
        // Predicated region
        $region21: #{tpu_custom_call.1} parent=11 // pred_check
          %p239 = pneg %p148
        $region22: #{tpu_custom_call.1} parent=11 // pred_check_branch
          %241 = sbr.rel (%p239) target = $region24
        $region23: #{tpu_custom_call.1} parent=11 // pred_region
          _
        $region24: #{tpu_custom_call.1} parent=11 // pred_fallthru
          _
        // Predicated region
        $region25: #{tpu_custom_call.1} parent=11 // pred_check
          %p242 = pneg %p169
        $region26: #{tpu_custom_call.1} parent=11 // pred_check_branch
          %244 = sbr.rel (%p242) target = $region28
        $region27: #{tpu_custom_call.1} parent=11 // pred_region
          _
        $region28: #{tpu_custom_call.1} parent=11 // pred_fallthru
          _
        // Predicated region
        $region29: #{tpu_custom_call.1} parent=11 // pred_check
          %p245 = pneg %p190
        $region30: #{tpu_custom_call.1} parent=11 // pred_check_branch
          %247 = sbr.rel (%p245) target = $region32
        $region31: #{tpu_custom_call.1} parent=11 // pred_region
          _
        $region32: #{tpu_custom_call.1} parent=11 // pred_fallthru
          _
      $region12: #{tpu_custom_call.1} parent=5 // pred_fallthru
        _
      %p248 = scmp.lt.s32.totalorder %s17, 2
      // Predicated region
      $region33: #{tpu_custom_call.1} parent=5 // pred_check
        %p249 = pneg %p248
      $region34: #{tpu_custom_call.1} parent=5 // pred_check_branch
        %251 = sbr.rel (%p249) target = $region36
      $region35: #{tpu_custom_call.1} parent=5 // pred_region
        // Predicated region
        $region37: #{tpu_custom_call.1} parent=35 // pred_check
          %p252 = pneg %p51
        $region38: #{tpu_custom_call.1} parent=35 // pred_check_branch
          %254 = sbr.rel (%p252) target = $region40
        $region39: #{tpu_custom_call.1} parent=35 // pred_region
          %s255 = smul.u32 2, %s25
          %p256 = scmp.lt.s32.totalorder %s24, 1
          %s257 = scalar_select %p256, %s24, 1
          %p258 = scmp.lt.s32.totalorder %s255, 1
          %s259 = scalar_select %p258, %s255, 1
          %s260 = smul.addr %s257, 2
          %s261 = sadd.s32 %s259, %s260
          %s262 = smul.addr %s261, 8
          %s263 = scalar_lea.vmem %s0, %s262
          %s264 = smul.u32 2, %s25
        $region40: #{tpu_custom_call.1} parent=35 // pred_fallthru
          _
        // Predicated region
        $region41: #{tpu_custom_call.1} parent=35 // pred_check
          %p265 = pneg %p79
        $region42: #{tpu_custom_call.1} parent=35 // pred_check_branch
          %267 = sbr.rel (%p265) target = $region44
        $region43: #{tpu_custom_call.1} parent=35 // pred_region
          %s268 = smul.u32 2, %s25
          %p269 = scmp.lt.s32.totalorder %s24, 1
          %s270 = scalar_select %p269, %s24, 1
          %p271 = scmp.lt.s32.totalorder %s268, 1
          %s272 = scalar_select %p271, %s268, 1
          %s273 = smul.addr %s270, 2
          %s274 = sadd.s32 %s272, %s273
          %s275 = smul.addr %s274, 8
          %s276 = scalar_lea.vmem %s1, %s275
          %s277 = smul.u32 2, %s25
        $region44: #{tpu_custom_call.1} parent=35 // pred_fallthru
          _
      $region36: #{tpu_custom_call.1} parent=5 // pred_fallthru
        _
      %p278 = scmp.le.s32.totalorder 1, %s17
      %p279 = scmp.lt.s32.totalorder %s17, 3
      %p280 = pnand %p278, %p279
      %p281 = pneg %p280
      // Predicated region
      $region45: #{tpu_custom_call.1} parent=5 // pred_check
        _
      $region46: #{tpu_custom_call.1} parent=5 // pred_check_branch
        %283 = sbr.rel (%p280) target = $region48
      $region47: #{tpu_custom_call.1} parent=5 // pred_region
        %s284 = ssub.s32 %s17, 1
        %s285 = smul.u32 2, %s27
        %p286 = scmp.lt.s32.totalorder %s26, 1
        %s287 = scalar_select %p286, %s26, 1
        %p288 = scmp.lt.s32.totalorder %s285, 1
        %s289 = scalar_select %p288, %s285, 1
        %s290 = smul.addr %s287, 2
        %s291 = sadd.s32 %s289, %s290
        %s292 = smul.addr %s291, 8
        %s293 = scalar_lea.vmem %s0, %s292
        %p294 = pneg %p57
        %p295 = pneg %p54
        %s296 = smul.u32 2, %s27
        %p297 = scmp.lt.s32.totalorder %s26, 1
        %s298 = scalar_select %p297, %s26, 1
        %p299 = scmp.lt.s32.totalorder %s296, 1
        %s300 = scalar_select %p299, %s296, 1
        %s301 = smul.addr %s298, 2
        %s302 = sadd.s32 %s300, %s301
        %s303 = smul.addr %s302, 8
        %s304 = scalar_lea.vmem %s1, %s303
        %p305 = pneg %p85
        %p306 = pneg %p82
        %p307 = pneg %p106
        %p308 = pneg %p103
        %p309 = pneg %p127
        %p310 = pneg %p124
        %p311 = pneg %p148
        %p312 = pneg %p145
        %p313 = pneg %p169
        %p314 = pneg %p166
        %p315 = pneg %p190
        %p316 = pneg %p187
        %p317 = pneg %p218
        %p318 = pneg %p215
        %s319 = sand.u32 %s205, 1
        %s320 = scalar_lea.sflag [#allocation4], %s319
        %s321 = sand.u32 %s205, 1
        %s322 = smul.addr %s321, 4
        %s323 = scalar_lea.vmem [#allocation3], %s322
        %s324 = smul.u32 2, %s27
        %p325 = scmp.lt.s32.totalorder %s26, 1
        %s326 = scalar_select %p325, %s26, 1
        %p327 = scmp.lt.s32.totalorder %s324, 1
        %s328 = scalar_select %p327, %s324, 1
        %s329 = smul.addr %s326, 2
        %s330 = sadd.s32 %s328, %s329
        %s331 = smul.addr %s330, 8
        %s332 = scalar_lea.vmem %s0, %s331
        %s333 = smul.u32 2, %s27
        %s334 = smul.u32 2, %s27
        %p335 = scmp.lt.s32.totalorder %s26, 1
        %s336 = scalar_select %p335, %s26, 1
        %p337 = scmp.lt.s32.totalorder %s334, 1
        %s338 = scalar_select %p337, %s334, 1
        %s339 = smul.addr %s336, 2
        %s340 = sadd.s32 %s338, %s339
        %s341 = smul.addr %s340, 8
        %s342 = scalar_lea.vmem %s1, %s341
        %s343 = smul.u32 2, %s27
        %s344 = smul.u32 2, %s27
        %v345 = vld [vmem:[%s332] sm:$0xff]
        %v346 = vld [vmem:[%s332 + $0x8] sm:$0xff]
        %v347 = vld [vmem:[%s342] sm:$0x3f]
        %v348 = vld [vmem:[%s342 + $0x8] sm:$0x3f]
        %v349 = vld [vmem:[%s2] sm:$0xff]
        %v350 = vld [vmem:[%s2 + $0x8] sm:$0xff]
        %v351 = vld [vmem:[%s2 + $0x10] sm:$0xff]
        %v352 = vld [vmem:[%s2 + $0x18] sm:$0xff]
        %v353 = vld [vmem:[%s3] sm:$0xff]
        %v354 = vld [vmem:[%s3 + $0x8] sm:$0xff]
        %v355 = vld [vmem:[%s3 + $0x10] sm:$0xff]
        %v356 = vld [vmem:[%s3 + $0x18] sm:$0xff]
        %vm357 = vcmask 48128
        %v359 = vsel %vm357, %v353, 0
        %v362 = vsel %vm357, %v354, 0
        %v365 = vsel %vm357, %v355, 0
        %v368 = vsel %vm357, %v356, 0
        %vm370 = vcmask 1045504
        %v372 = vsel %vm370, %v347, 0
        %v375 = vsel %vm370, %v348, 0
        %377 = vmatprep.subr.mxu0 %v375
        %378 = vmatpush1.msra.mxu0 %v372
        %379 = vmatprep.subr.mxu0 0.0
        %380 = vmatpush1.msra.mxu0 0.0
        %381 = vmatprep.subr.mxu0 0.0
        %382 = vmatpush1.msra.mxu0 0.0
        %383 = vmatprep.subr.mxu0 0.0
        %384 = vmatpush1.msra.mxu0 0.0
        %385 = vmatprep.subr.mxu0 0.0
        %386 = vmatpush1.msra.mxu0 0.0
        %387 = vmatprep.subr.mxu0 0.0
        %388 = vmatpush1.msra.mxu0 0.0
        %389 = vmatprep.subr.mxu0 0.0
        %390 = vmatpush1.msra.mxu0 0.0
        %391 = vmatprep.subr.mxu0 0.0
        %392 = vmatpush1.msra.mxu0 0.0
        %393 = vmatprep.subr.mxu0 0.0
        %394 = vmatpush1.msra.mxu0 0.0
        %395 = vmatprep.subr.mxu0 0.0
        %396 = vmatpush1.msra.mxu0 0.0
        %397 = vmatprep.subr.mxu0 0.0
        %398 = vmatpush1.msra.mxu0 0.0
        %399 = vmatprep.subr.mxu0 0.0
        %400 = vmatpush1.msra.mxu0 0.0
        %401 = vmatprep.subr.mxu0 0.0
        %402 = vmatpush1.msra.mxu0 0.0
        %403 = vmatprep.subr.mxu0 0.0
        %404 = vmatpush1.msra.mxu0 0.0
        %405 = vmatprep.subr.mxu0 0.0
        %406 = vmatpush1.msra.mxu0 0.0
        %407 = vmatprep.subr.mxu0 0.0
        %408 = vmatpush1.msra.mxu0 0.0
        %409 = vmatprep.subr.mxu0 0.0
        %410 = vmatpush1.msra.mxu0 0.0
        %411 = vmatprep.subr.mxu0 0.0
        %412 = vmatpush1.msra.mxu0 0.0
        %413 = vmatprep.subr.mxu0 0.0
        %414 = vmatpush1.msra.mxu0 0.0
        %415 = vmatprep.subr.mxu0 0.0
        %416 = vmatpush1.msra.mxu0 0.0
        %417 = vmatprep.subr.mxu0 0.0
        %418 = vmatpush1.msra.mxu0 0.0
        %419 = vmatprep.subr.mxu0 0.0
        %420 = vmatpush1.msra.mxu0 0.0
        %421 = vmatprep.subr.mxu0 0.0
        %422 = vmatpush1.msra.mxu0 0.0
        %423 = vmatprep.subr.mxu0 0.0
        %424 = vmatpush1.msra.mxu0 0.0
        %425 = vmatprep.subr.mxu0 0.0
        %426 = vmatpush1.msra.mxu0 0.0
        %427 = vmatprep.subr.mxu0 0.0
        %428 = vmatpush1.msra.mxu0 0.0
        %429 = vmatprep.subr.mxu0 0.0
        %430 = vmatpush1.msra.mxu0 0.0
        %431 = vmatprep.subr.mxu0 0.0
        %432 = vmatpush1.msra.mxu0 0.0
        %433 = vmatprep.subr.mxu0 0.0
        %434 = vmatpush1.msra.mxu0 0.0
        %435 = vmatprep.subr.mxu0 0.0
        %436 = vmatpush1.msra.mxu0 0.0
        %437 = vmatprep.subr.mxu0 0.0
        %438 = vmatpush1.msra.mxu0 0.0
        %439 = vmatprep.subr.mxu0 0.0
        %440 = vmatpush1.msra.mxu0 0.0
        %441 = vmatprep.mubr.f32.mxu0 0.0
        %442 = vmatmul.mubr.f32.gmra.mrb[0].mxu0 %v359
        %v443 = vpop.f32.mrb[0].mxu0
        %v444 = vadd.f32 0.0, %v443
        %v445 = vpop.f32.mrb[0].mxu0
        %v446 = vadd.f32 0.0, %v445
        %447 = vmatprep.mubr.f32.mxu0 0.0
        %448 = vmatmul.mubr.f32.gmra.mrb[0].mxu0 %v362
        %v449 = vpop.f32.mrb[0].mxu0
        %v450 = vadd.f32 0.0, %v449
        %v451 = vpop.f32.mrb[0].mxu0
        %v452 = vadd.f32 0.0, %v451
        %453 = vmatprep.mubr.f32.mxu0 0.0
        %454 = vmatmul.mubr.f32.gmra.mrb[0].mxu0 %v365
        %v455 = vpop.f32.mrb[0].mxu0
        %v456 = vadd.f32 0.0, %v455
        %v457 = vpop.f32.mrb[0].mxu0
        %v458 = vadd.f32 0.0, %v457
        %459 = vmatprep.mubr.f32.mxu0 0.0
        %460 = vmatmul.mubr.f32.gmra.mrb[0].mxu0 %v368
        %v461 = vpop.f32.mrb[0].mxu0
        %v462 = vadd.f32 0.0, %v461
        %v463 = vpop.f32.mrb[0].mxu0
        %v464 = vadd.f32 0.0, %v463
        %465 = vdwg.mxu0
        %vm466 = vcmask 64512
        %v468 = vsel %vm466, %v349, 0
        %v471 = vsel %vm466, %v350, 0
        %v474 = vsel %vm466, %v351, 0
        %v477 = vsel %vm466, %v352, 0
        %479 = vmatprep.subr.mxu0 %v346
        %480 = vmatpush1.msra.mxu0 %v345
        %481 = vmatprep.subr.mxu0 0.0
        %482 = vmatpush1.msra.mxu0 0.0
        %483 = vmatprep.subr.mxu0 0.0
        %484 = vmatpush1.msra.mxu0 0.0
        %485 = vmatprep.subr.mxu0 0.0
        %486 = vmatpush1.msra.mxu0 0.0
        %487 = vmatprep.subr.mxu0 0.0
        %488 = vmatpush1.msra.mxu0 0.0
        %489 = vmatprep.subr.mxu0 0.0
        %490 = vmatpush1.msra.mxu0 0.0
        %491 = vmatprep.subr.mxu0 0.0
        %492 = vmatpush1.msra.mxu0 0.0
        %493 = vmatprep.subr.mxu0 0.0
        %494 = vmatpush1.msra.mxu0 0.0
        %495 = vmatprep.subr.mxu0 0.0
        %496 = vmatpush1.msra.mxu0 0.0
        %497 = vmatprep.subr.mxu0 0.0
        %498 = vmatpush1.msra.mxu0 0.0
        %499 = vmatprep.subr.mxu0 0.0
        %500 = vmatpush1.msra.mxu0 0.0
        %501 = vmatprep.subr.mxu0 0.0
        %502 = vmatpush1.msra.mxu0 0.0
        %503 = vmatprep.subr.mxu0 0.0
        %504 = vmatpush1.msra.mxu0 0.0
        %505 = vmatprep.subr.mxu0 0.0
        %506 = vmatpush1.msra.mxu0 0.0
        %507 = vmatprep.subr.mxu0 0.0
        %508 = vmatpush1.msra.mxu0 0.0
        %509 = vmatprep.subr.mxu0 0.0
        %510 = vmatpush1.msra.mxu0 0.0
        %511 = vmatprep.subr.mxu0 0.0
        %512 = vmatpush1.msra.mxu0 0.0
        %513 = vmatprep.subr.mxu0 0.0
        %514 = vmatpush1.msra.mxu0 0.0
        %515 = vmatprep.subr.mxu0 0.0
        %516 = vmatpush1.msra.mxu0 0.0
        %517 = vmatprep.subr.mxu0 0.0
        %518 = vmatpush1.msra.mxu0 0.0
        %519 = vmatprep.subr.mxu0 0.0
        %520 = vmatpush1.msra.mxu0 0.0
        %521 = vmatprep.subr.mxu0 0.0
        %522 = vmatpush1.msra.mxu0 0.0
        %523 = vmatprep.subr.mxu0 0.0
        %524 = vmatpush1.msra.mxu0 0.0
        %525 = vmatprep.subr.mxu0 0.0
        %526 = vmatpush1.msra.mxu0 0.0
        %527 = vmatprep.subr.mxu0 0.0
        %528 = vmatpush1.msra.mxu0 0.0
        %529 = vmatprep.subr.mxu0 0.0
        %530 = vmatpush1.msra.mxu0 0.0
        %531 = vmatprep.subr.mxu0 0.0
        %532 = vmatpush1.msra.mxu0 0.0
        %533 = vmatprep.subr.mxu0 0.0
        %534 = vmatpush1.msra.mxu0 0.0
        %535 = vmatprep.subr.mxu0 0.0
        %536 = vmatpush1.msra.mxu0 0.0
        %537 = vmatprep.subr.mxu0 0.0
        %538 = vmatpush1.msra.mxu0 0.0
        %539 = vmatprep.subr.mxu0 0.0
        %540 = vmatpush1.msra.mxu0 0.0
        %541 = vmatprep.subr.mxu0 0.0
        %542 = vmatpush1.msra.mxu0 0.0
        %543 = vmatprep.mubr.f32.mxu0 0.0
        %544 = vmatmul.mubr.f32.gmra.mrb[0].mxu0 %v468
        %v545 = vpop.f32.mrb[0].mxu0
        %v546 = vadd.f32 %v444, %v545
        %v547 = vpop.f32.mrb[0].mxu0
        %v548 = vadd.f32 %v446, %v547
        %549 = vmatprep.mubr.f32.mxu0 0.0
        %550 = vmatmul.mubr.f32.gmra.mrb[0].mxu0 %v471
        %v551 = vpop.f32.mrb[0].mxu0
        %v552 = vadd.f32 %v450, %v551
        %v553 = vpop.f32.mrb[0].mxu0
        %v554 = vadd.f32 %v452, %v553
        %555 = vmatprep.mubr.f32.mxu0 0.0
        %556 = vmatmul.mubr.f32.gmra.mrb[0].mxu0 %v474
        %v557 = vpop.f32.mrb[0].mxu0
        %v558 = vadd.f32 %v456, %v557
        %v559 = vpop.f32.mrb[0].mxu0
        %v560 = vadd.f32 %v458, %v559
        %561 = vmatprep.mubr.f32.mxu0 0.0
        %562 = vmatmul.mubr.f32.gmra.mrb[0].mxu0 %v477
        %v563 = vpop.f32.mrb[0].mxu0
        %v564 = vadd.f32 %v462, %v563
        %v565 = vpop.f32.mrb[0].mxu0
        %v566 = vadd.f32 %v464, %v565
        %567 = vdwg.mxu0
        %v568 = vld [vmem:[%s4] sm:$0xff]
        %v569 = vld [vmem:[%s4 + $0x8] sm:$0xff]
        %v570 = vld [vmem:[%s4 + $0x10] sm:$0xff]
        %v571 = vld [vmem:[%s4 + $0x18] sm:$0xff]
        %573 = vset.pattern.permute.xlu0 0
        %574 = vperm.xlu0 %573, %v568
        %v575 = vpop.permute.xlu0 %574
        %578 = vset.pattern.permute.xlu0 0
        %579 = vperm.xlu0 %578, %v569
        %v580 = vpop.permute.xlu0 %579
        %583 = vset.pattern.permute.xlu0 0
        %584 = vperm.xlu0 %583, %v570
        %v585 = vpop.permute.xlu0 %584
        %588 = vset.pattern.permute.xlu0 0
        %589 = vperm.xlu0 %588, %v571
        %v590 = vpop.permute.xlu0 %589
        %v592 = vadd.f32 %v546, %v575
        %v593 = vadd.f32 %v548, %v575
        %v594 = vadd.f32 %v552, %v580
        %v595 = vadd.f32 %v554, %v580
        %v596 = vadd.f32 %v558, %v585
        %v597 = vadd.f32 %v560, %v585
        %v598 = vadd.f32 %v564, %v590
        %v599 = vadd.f32 %v566, %v590
        %v600 = vmul.f32 %v592, 0.2
        %v601 = vmul.f32 %v593, 0.2
        %v602 = vmul.f32 %v594, 0.2
        %v603 = vmul.f32 %v595, 0.2
        %v604 = vmul.f32 %v596, 0.2
        %v605 = vmul.f32 %v597, 0.2
        %v606 = vmul.f32 %v598, 0.2
        %v607 = vmul.f32 %v599, 0.2
        %v608 = vmax.f32 %v592, %v600
        %v609 = vmax.f32 %v593, %v601
        %v610 = vmax.f32 %v594, %v602
        %v611 = vmax.f32 %v595, %v603
        %v612 = vmax.f32 %v596, %v604
        %v613 = vmax.f32 %v597, %v605
        %v614 = vmax.f32 %v598, %v606
        %v615 = vmax.f32 %v599, %v607
        %v616 = vld [vmem:[%s5] sm:$0x1]
        %s617 = sld [smem:[#allocation2]]
        %v618 = vstv %s617
        %vm619 = vcmask 261120
        %v621 = vsel %vm619, %v616, 0
        %623 = vmatprep.subr.mxu0 %v609
        %624 = vmatpush1.msra.mxu0 %v608
        %625 = vmatprep.subr.mxu0 %v611
        %626 = vmatpush1.msra.mxu0 %v610
        %627 = vmatprep.subr.mxu0 %v613
        %628 = vmatpush1.msra.mxu0 %v612
        %629 = vmatprep.subr.mxu0 %v615
        %630 = vmatpush1.msra.mxu0 %v614
        %631 = vmatprep.subr.mxu0 0.0
        %632 = vmatpush1.msra.mxu0 0.0
        %633 = vmatprep.subr.mxu0 0.0
        %634 = vmatpush1.msra.mxu0 0.0
        %635 = vmatprep.subr.mxu0 0.0
        %636 = vmatpush1.msra.mxu0 0.0
        %637 = vmatprep.subr.mxu0 0.0
        %638 = vmatpush1.msra.mxu0 0.0
        %639 = vmatprep.subr.mxu0 0.0
        %640 = vmatpush1.msra.mxu0 0.0
        %641 = vmatprep.subr.mxu0 0.0
        %642 = vmatpush1.msra.mxu0 0.0
        %643 = vmatprep.subr.mxu0 0.0
        %644 = vmatpush1.msra.mxu0 0.0
        %645 = vmatprep.subr.mxu0 0.0
        %646 = vmatpush1.msra.mxu0 0.0
        %647 = vmatprep.subr.mxu0 0.0
        %648 = vmatpush1.msra.mxu0 0.0
        %649 = vmatprep.subr.mxu0 0.0
        %650 = vmatpush1.msra.mxu0 0.0
        %651 = vmatprep.subr.mxu0 0.0
        %652 = vmatpush1.msra.mxu0 0.0
        %653 = vmatprep.subr.mxu0 0.0
        %654 = vmatpush1.msra.mxu0 0.0
        %655 = vmatprep.subr.mxu0 0.0
        %656 = vmatpush1.msra.mxu0 0.0
        %657 = vmatprep.subr.mxu0 0.0
        %658 = vmatpush1.msra.mxu0 0.0
        %659 = vmatprep.subr.mxu0 0.0
        %660 = vmatpush1.msra.mxu0 0.0
        %661 = vmatprep.subr.mxu0 0.0
        %662 = vmatpush1.msra.mxu0 0.0
        %663 = vmatprep.subr.mxu0 0.0
        %664 = vmatpush1.msra.mxu0 0.0
        %665 = vmatprep.subr.mxu0 0.0
        %666 = vmatpush1.msra.mxu0 0.0
        %667 = vmatprep.subr.mxu0 0.0
        %668 = vmatpush1.msra.mxu0 0.0
        %669 = vmatprep.subr.mxu0 0.0
        %670 = vmatpush1.msra.mxu0 0.0
        %671 = vmatprep.subr.mxu0 0.0
        %672 = vmatpush1.msra.mxu0 0.0
        %673 = vmatprep.subr.mxu0 0.0
        %674 = vmatpush1.msra.mxu0 0.0
        %675 = vmatprep.subr.mxu0 0.0
        %676 = vmatpush1.msra.mxu0 0.0
        %677 = vmatprep.subr.mxu0 0.0
        %678 = vmatpush1.msra.mxu0 0.0
        %679 = vmatprep.subr.mxu0 0.0
        %680 = vmatpush1.msra.mxu0 0.0
        %681 = vmatprep.subr.mxu0 0.0
        %682 = vmatpush1.msra.mxu0 0.0
        %683 = vmatprep.subr.mxu0 0.0
        %684 = vmatpush1.msra.mxu0 0.0
        %685 = vmatprep.subr.mxu0 0.0
        %686 = vmatpush1.msra.mxu0 0.0
        %687 = vmatprep.mubr.f32.mxu0 0.0
        %688 = vmatmul.mubr.f32.gmra.mrb[0].mxu0 %v621
        %v689 = vpop.f32.mrb[0].mxu0
        %v690 = vadd.f32 %v618, %v689
        %v691 = vpop.f32.mrb[0].mxu0
        %v692 = vadd.f32 %v618, %v691
        %693 = vdwg.mxu0
        %v694 = vxor.u32 %v690, 2147483648
        %v695 = vxor.u32 %v692, 2147483648
        %v696 = vmul.f32 %v694, 1.442695
        %v697 = vpow.pop %v696
        %v698 = vmul.f32 %v695, 1.442695
        %v699 = vpow.pop %v698
        %v700 = vadd.f32 %v697, 1.0
        %v701 = vadd.f32 %v699, 1.0
        %v702 = vrcp.pop %v700
        %v703 = vmul.f32 1.0, %v702
        %v704 = vrcp.pop %v701
        %v705 = vmul.f32 1.0, %v704
        %v706 = vsub.f32 1.0, %v703
        %v707 = vsub.f32 1.0, %v705
        %v710 = vrot.slane %v706, 7
        %v711 = vrot.slane %v707, 7
        %vm714 = vcmask 1040384
        %v715 = vsel %vm714, %v703, %v710
        %v716 = vsel %vm714, %v705, %v711
        %v719 = vcombine.low %v715, %v716
        %v721 = vunpack.c.l.s4 1983009808
        %v722 = vunpack.c.0.s8 %v721
        %v723 = vlaneseq
        %v724 = vshrl.u32 %v723, 7
        %v725 = vsub.s32 %v722, %v724
        %v726 = vrot.slane %v719, %v725
        %728 = vst [vmem:[%s323] sm:$0xf] %v726
        %s729 = sand.u32 %s205, 1
        %s730 = scalar_lea.sflag [#allocation4], %s729
        %s731 = sand.u32 %s205, 1
        %s732 = smul.addr %s731, 4
        %s733 = scalar_lea.vmem [#allocation3], %s732
        // Predicated region
        $region49: #{tpu_custom_call.1} parent=47 // pred_check
          %p734 = pneg %p215
        $region50: #{tpu_custom_call.1} parent=47 // pred_check_branch
          %736 = sbr.rel (%p734) target = $region52
        $region51: #{tpu_custom_call.1} parent=47 // pred_region
          %s737 = smul.u32 2, %s27
          %s739 = ssub.s32 64, 64
          %740 = vsyncadd %s730, %s739
          %s741 = smul.addr %s26, 2
          %s742 = sadd.s32 %s737, %s741
          %s743 = smul.addr %s742, 32
          %s744 = scalar_lea.hbm %s7, %s743
          %s746 = sshll.u32 %s733, 4
          %s747 = int_to_ptr.vmem [resolvable:$true] %s746
          %749 = dma.vmem_to_hbm [thread:$0]  %s747, 64, %s744, %s730
        $region52: #{tpu_custom_call.1} parent=47 // pred_fallthru
          _
      $region48: #{tpu_custom_call.1} parent=5 // pred_fallthru
        _
      %p750 = scmp.le.s32.totalorder 2, %s17
      // Predicated region
      $region53: #{tpu_custom_call.1} parent=5 // pred_check
        %p751 = pneg %p750
      $region54: #{tpu_custom_call.1} parent=5 // pred_check_branch
        %753 = sbr.rel (%p751) target = $region56
      $region55: #{tpu_custom_call.1} parent=5 // pred_region
        %s754 = ssub.s32 %s17, 2
        // Predicated region
        $region57: #{tpu_custom_call.1} parent=55 // pred_check
          %p755 = pneg %p221
        $region58: #{tpu_custom_call.1} parent=55 // pred_check_branch
          %757 = sbr.rel (%p755) target = $region60
        $region59: #{tpu_custom_call.1} parent=55 // pred_region
          %s758 = sand.u32 %s206, 1
          %s759 = scalar_lea.sflag [#allocation4], %s758
          %s760 = sand.u32 %s206, 1
          %s761 = smul.addr %s760, 4
          %s762 = scalar_lea.vmem [#allocation3], %s761
          %763 = dma.done %s759, 64
        $region60: #{tpu_custom_call.1} parent=55 // pred_fallthru
          _
      $region56: #{tpu_custom_call.1} parent=5 // pred_fallthru
        _
    $region6: #{tpu_custom_call.1} parent=1 // loop_footer
      %s21 = sadd.s32 1, %s17
    $region7: #{tpu_custom_call.1} parent=1 // loop_footer_branch
      %16 = sbr.rel target = $region3
    $region8: #{tpu_custom_call.1} parent=1 // loop_exit
      _
    %764 = vsyncpa [#allocation4], 1
    %s765 = scalar_lea.sflag [#allocation4], 1
    %766 = vsyncpa %s765, 1

</llo_original>
